<compile_context>
chip_gen: v5e
topology: v5e:2x2
jax: 0.10.0
libtpu: 0.0.40
codegen_flags: <defaults>
</compile_context>

<pallas_src>
import functools

import jax
import jax.numpy as jnp
from jax import lax
from jax.experimental import pallas as pl
from jax.experimental.pallas import tpu as pltpu


def _round_up(x, m):
    return ((x + m - 1) // m) * m


def _linear_lora_kernel(x_ref, w_ref, b_ref, wa_ref, wb_ref, o_ref,
                        acc_ref, xa_ref, *, rank):
    n = pl.program_id(1)
    k = pl.program_id(2)
    nk = pl.num_programs(2)

    @pl.when(k == 0)
    def _():
        acc_ref[...] = jnp.zeros_like(acc_ref)

    @pl.when(jnp.logical_and(n == 0, k == 0))
    def _():
        xa_ref[...] = jnp.zeros_like(xa_ref)

    x = x_ref[...]                                        # (tm, tk)

    # Base GEMM with W in torch layout (tn, tk): contract over the in-dim.
    acc_ref[...] += lax.dot_general(
        x, w_ref[...],
        dimension_numbers=(((1,), (1,)), ((), ())),
        preferred_element_type=jnp.float32)

    # LoRA down-projection accumulated over K; computed once per M tile
    # (at n == 0) and reused from the persistent scratch for other N tiles.
    @pl.when(n == 0)
    def _():
        xa_ref[...] += jnp.dot(x, wa_ref[...],
                               preferred_element_type=jnp.float32)

    @pl.when(k == nk - 1)
    def _():
        out = acc_ref[...] + b_ref[...].astype(jnp.float32)   # (tm, tn)
        xa = xa_ref[...]                                       # (tm, R) f32
        wb = wb_ref[...].astype(jnp.float32)                   # (R, tn), alpha folded in
        if rank <= 8:
            # Rank-R up-projection as R broadcast FMAs on the VPU.
            for r in range(rank):
                out = out + xa[:, r:r + 1] * wb[r:r + 1, :]
        else:
            out = out + jnp.dot(xa, wb, preferred_element_type=jnp.float32)
        o_ref[...] = out.astype(o_ref.dtype)


def linear_with_lora(x, w, b, w_a, w_b, alpha, *,
                     tm=256, tn=256, tk=512, compute_dtype=None):
    """Fused y = x @ W^T + b + alpha * ((x @ w_a) @ w_b).

    x: [..., in_dim]; w: [out_dim, in_dim] (torch nn.Linear layout);
    b: [out_dim]; w_a: [in_dim, rank]; w_b: [rank, out_dim].
    compute_dtype: e.g. jnp.bfloat16 for full MXU rate with f32 accumulation.
    """
    *lead, in_dim = x.shape
    out_dim = w.shape[0]
    rank = w_a.shape[1]

    x2 = x.reshape(-1, in_dim)
    M = x2.shape[0]
    out_dtype = x.dtype

    # Fold alpha into w_b (tiny: rank x out_dim) before any dtype cast.
    wb_scaled = w_b * jnp.asarray(alpha, w_b.dtype)

    if compute_dtype is not None:
        x2 = x2.astype(compute_dtype)
        w = w.astype(compute_dtype)
        w_a = w_a.astype(compute_dtype)
        wb_scaled = wb_scaled.astype(compute_dtype)

    # Tile sizes clamped to the (padded) problem; mins respect (8,128) layout.
    tm = min(tm, _round_up(M, 8))
    tn = min(tn, _round_up(out_dim, 128))
    tk = min(tk, _round_up(in_dim, 128))

    Mp = _round_up(M, tm)
    Np = _round_up(out_dim, tn)
    Kp = _round_up(in_dim, tk)

    # Zero-pad to tile multiples only when required (avoids extra HBM copies
    # on already-aligned shapes).
    # TODO(synk): for static LoRA serving, pre-pad / pre-merge weights once
    # outside the per-call path instead of padding here.
    if (Mp, Kp) != (M, in_dim):
        x2 = jnp.pad(x2, ((0, Mp - M), (0, Kp - in_dim)))
    if (Np, Kp) != (out_dim, in_dim):
        w = jnp.pad(w, ((0, Np - out_dim), (0, Kp - in_dim)))
    bp = b if Np == out_dim else jnp.pad(b, (0, Np - out_dim))
    bp = bp.reshape(1, Np)
    wap = w_a if Kp == in_dim else jnp.pad(w_a, ((0, Kp - in_dim), (0, 0)))
    wbp = (wb_scaled if Np == out_dim
           else jnp.pad(wb_scaled, ((0, 0), (0, Np - out_dim))))

    grid = (Mp // tm, Np // tn, Kp // tk)
    kernel = functools.partial(_linear_lora_kernel, rank=rank)

    out = pl.pallas_call(
        kernel,
        out_shape=jax.ShapeDtypeStruct((Mp, Np), out_dtype),
        grid_spec=pltpu.PrefetchScalarGridSpec(
            num_scalar_prefetch=0,
            grid=grid,
            in_specs=[
                pl.BlockSpec((tm, tk), lambda i, n, k: (i, k)),     # x
                pl.BlockSpec((tn, tk), lambda i, n, k: (n, k)),     # W (torch layout)
                pl.BlockSpec((1, tn), lambda i, n, k: (0, n)),      # bias
                pl.BlockSpec((tk, rank), lambda i, n, k: (k, 0)),   # w_a
                pl.BlockSpec((rank, tn), lambda i, n, k: (0, n)),   # alpha * w_b
            ],
            out_specs=pl.BlockSpec((tm, tn), lambda i, n, k: (i, n)),
            scratch_shapes=[
                pltpu.VMEM((tm, tn), jnp.float32),    # base f32 accumulator
                pltpu.VMEM((tm, rank), jnp.float32),  # x @ w_a f32 accumulator
            ]),
        compiler_params=pltpu.CompilerParams(
            # M parallel -> megacore sharding on v7x (no-op on v5e/v6e).
            # N must stay sequential per core so the x@w_a scratch computed at
            # n==0 is valid for the remaining N tiles of that M tile; K is the
            # reduction axis and goes last.
            dimension_semantics=("parallel", "arbitrary", "arbitrary")),
    )(x2, w, bp, wap, wbp)

    out = out[:M, :out_dim]
    return out.reshape(*lead, out_dim)


if __name__ == "__main__":
    key = jax.random.PRNGKey(0)
    batch, seq, in_dim, out_dim, rank, alpha = 2, 8, 32, 64, 4, 2.0

    k_x, k_w, k_b, k_a, k_bb = jax.random.split(key, 5)
    x = jax.random.normal(k_x, (batch, seq, in_dim), dtype=jnp.float32)

    # nn.Linear(in_dim, out_dim): weight (out_dim, in_dim), bias (out_dim)
    w = jax.random.normal(k_w, (out_dim, in_dim), dtype=jnp.float32) * 0.1
    b = jax.random.normal(k_b, (out_dim,), dtype=jnp.float32) * 0.1

    # LoRA params (module inits w_b to zeros; use a nonzero one here so the
    # LoRA path is actually exercised by the numerical check).
    std_dev = 1.0 / jnp.sqrt(jnp.float32(rank))
    w_a = jax.random.normal(k_a, (in_dim, rank), dtype=jnp.float32) * std_dev
    w_b = jax.random.normal(k_bb, (rank, out_dim), dtype=jnp.float32) * 0.05

    out = linear_with_lora(x, w, b, w_a, w_b, alpha)
    out = jax.block_until_ready(out)

    # Pure-JAX reference check
    ref = x @ w.T + b + alpha * ((x @ w_a) @ w_b)
    assert out.shape == (batch, seq, out_dim)
    assert jnp.allclose(out, ref, atol=1e-4, rtol=1e-4), float(
        jnp.max(jnp.abs(out - ref)))

    print("KERNEL_OK")
</pallas_src>

<mosaic_0001>
module attributes {stable_mosaic.version = 11 : i64} {
  func.func @_linear_lora_kernel(%arg0: i32, %arg1: i32, %arg2: i32, %arg3: memref<16x128xf32, #tpu.memory_space<vmem>>, %arg4: memref<128x128xf32, #tpu.memory_space<vmem>>, %arg5: memref<1x128xf32, #tpu.memory_space<vmem>>, %arg6: memref<128x4xf32, #tpu.memory_space<vmem>>, %arg7: memref<4x128xf32, #tpu.memory_space<vmem>>, %arg8: memref<16x128xf32, #tpu.memory_space<vmem>>, %arg9: memref<16x128xf32, #tpu.memory_space<vmem>>, %arg10: memref<16x4xf32, #tpu.memory_space<vmem>>) attributes {dimension_semantics = [#tpu.dimension_semantics<parallel>, #tpu.dimension_semantics<arbitrary>, #tpu.dimension_semantics<arbitrary>], iteration_bounds = array<i64: 1, 1, 1>, scalar_prefetch = 0 : i64, scratch_operands = 2 : i64, tpu.core_type = #tpu.core_type<tc>, window_params = [{transform_indices = @transform_0, window_bounds = array<i64: 16, 128>}, {transform_indices = @transform_1, window_bounds = array<i64: 128, 128>}, {transform_indices = @transform_2, window_bounds = array<i64: 1, 128>}, {transform_indices = @transform_3, window_bounds = array<i64: 128, 4>}, {transform_indices = @transform_4, window_bounds = array<i64: 4, 128>}, {transform_indices = @transform_5, window_bounds = array<i64: 16, 128>}]} {
    %c0_i32 = arith.constant 0 : i32
    %0 = arith.cmpi eq, %arg2, %c0_i32 : i32
    %1 = arith.extui %0 : i1 to i32
    %c0_i32_0 = arith.constant 0 : i32
    %2 = arith.cmpi ne, %1, %c0_i32_0 : i32
    scf.if %2 {
      %cst_15 = arith.constant 0.000000e+00 : f32
      %20 = vector.broadcast %cst_15 : f32 to vector<16x128xf32>
      %c0_16 = arith.constant 0 : index
      %c0_17 = arith.constant 0 : index
      %21 = vector.load %arg9[%c0_16, %c0_17] : memref<16x128xf32, #tpu.memory_space<vmem>>, vector<16x128xf32>
      tpu.vector_store %arg9[%c0_16, %c0_17], %20 {strides = array<i32>} : memref<16x128xf32, #tpu.memory_space<vmem>>, vector<16x128xf32>,
    } else {
    }
    %c0_i32_1 = arith.constant 0 : i32
    %3 = arith.cmpi eq, %arg1, %c0_i32_1 : i32
    %c0_i32_2 = arith.constant 0 : i32
    %4 = arith.cmpi eq, %arg2, %c0_i32_2 : i32
    %5 = arith.andi %3, %4 : i1
    %6 = arith.extui %5 : i1 to i32
    %c0_i32_3 = arith.constant 0 : i32
    %7 = arith.cmpi ne, %6, %c0_i32_3 : i32
    scf.if %7 {
      %cst_15 = arith.constant 0.000000e+00 : f32
      %20 = vector.broadcast %cst_15 : f32 to vector<16x4xf32>
      %c0_16 = arith.constant 0 : index
      %c0_17 = arith.constant 0 : index
      %21 = vector.load %arg10[%c0_16, %c0_17] : memref<16x4xf32, #tpu.memory_space<vmem>>, vector<16x4xf32>
      tpu.vector_store %arg10[%c0_16, %c0_17], %20 {strides = array<i32>} : memref<16x4xf32, #tpu.memory_space<vmem>>, vector<16x4xf32>,
    } else {
    }
    %c0 = arith.constant 0 : index
    %c0_4 = arith.constant 0 : index
    %8 = vector.load %arg3[%c0, %c0_4] : memref<16x128xf32, #tpu.memory_space<vmem>>, vector<16x128xf32>
    %c0_5 = arith.constant 0 : index
    %c0_6 = arith.constant 0 : index
    %9 = vector.load %arg9[%c0_5, %c0_6] : memref<16x128xf32, #tpu.memory_space<vmem>>, vector<16x128xf32>
    %c0_7 = arith.constant 0 : index
    %c0_8 = arith.constant 0 : index
    %10 = vector.load %arg4[%c0_7, %c0_8] : memref<128x128xf32, #tpu.memory_space<vmem>>, vector<128x128xf32>
    %cst = arith.constant dense<0.000000e+00> : vector<16x128xf32>
    %11 = tpu.matmul %8, %10, %cst {dimension_numbers = #tpu.dot_dimension_numbers<[1], [1], [0], [0], [0, 0, 1, 0], [], []>} : vector<16x128xf32>, vector<128x128xf32>, vector<16x128xf32> -> vector<16x128xf32>
    %12 = arith.addf %9, %11 : vector<16x128xf32>
    %c0_9 = arith.constant 0 : index
    %c0_10 = arith.constant 0 : index
    %13 = vector.load %arg9[%c0_9, %c0_10] : memref<16x128xf32, #tpu.memory_space<vmem>>, vector<16x128xf32>
    tpu.vector_store %arg9[%c0_9, %c0_10], %12 {strides = array<i32>} : memref<16x128xf32, #tpu.memory_space<vmem>>, vector<16x128xf32>,
    %c0_i32_11 = arith.constant 0 : i32
    %14 = arith.cmpi eq, %arg1, %c0_i32_11 : i32
    %15 = arith.extui %14 : i1 to i32
    %c0_i32_12 = arith.constant 0 : i32
    %16 = arith.cmpi ne, %15, %c0_i32_12 : i32
    scf.if %16 {
      %c0_15 = arith.constant 0 : index
      %c0_16 = arith.constant 0 : index
      %20 = vector.load %arg10[%c0_15, %c0_16] : memref<16x4xf32, #tpu.memory_space<vmem>>, vector<16x4xf32>
      %c0_17 = arith.constant 0 : index
      %c0_18 = arith.constant 0 : index
      %21 = vector.load %arg6[%c0_17, %c0_18] : memref<128x4xf32, #tpu.memory_space<vmem>>, vector<128x4xf32>
      %cst_19 = arith.constant dense<0.000000e+00> : vector<16x4xf32>
      %22 = tpu.matmul %8, %21, %cst_19 {dimension_numbers = #tpu.dot_dimension_numbers<[1], [0], [0], [1], [0, 0, 1, 1], [], []>} : vector<16x128xf32>, vector<128x4xf32>, vector<16x4xf32> -> vector<16x4xf32>
      %23 = arith.addf %20, %22 : vector<16x4xf32>
      %c0_20 = arith.constant 0 : index
      %c0_21 = arith.constant 0 : index
      %24 = vector.load %arg10[%c0_20, %c0_21] : memref<16x4xf32, #tpu.memory_space<vmem>>, vector<16x4xf32>
      tpu.vector_store %arg10[%c0_20, %c0_21], %23 {strides = array<i32>} : memref<16x4xf32, #tpu.memory_space<vmem>>, vector<16x4xf32>,
    } else {
    }
    %c0_i32_13 = arith.constant 0 : i32
    %17 = arith.cmpi eq, %arg2, %c0_i32_13 : i32
    %18 = arith.extui %17 : i1 to i32
    %c0_i32_14 = arith.constant 0 : i32
    %19 = arith.cmpi ne, %18, %c0_i32_14 : i32
    scf.if %19 {
      %c0_15 = arith.constant 0 : index
      %c0_16 = arith.constant 0 : index
      %20 = vector.load %arg9[%c0_15, %c0_16] : memref<16x128xf32, #tpu.memory_space<vmem>>, vector<16x128xf32>
      %c0_17 = arith.constant 0 : index
      %c0_18 = arith.constant 0 : index
      %21 = vector.load %arg5[%c0_17, %c0_18] : memref<1x128xf32, #tpu.memory_space<vmem>>, vector<1x128xf32>
      %22 = vector.broadcast %21 : vector<1x128xf32> to vector<16x128xf32>
      %23 = arith.addf %20, %22 : vector<16x128xf32>
      %c0_19 = arith.constant 0 : index
      %c0_20 = arith.constant 0 : index
      %24 = vector.load %arg10[%c0_19, %c0_20] : memref<16x4xf32, #tpu.memory_space<vmem>>, vector<16x4xf32>
      %c0_21 = arith.constant 0 : index
      %c0_22 = arith.constant 0 : index
      %25 = vector.load %arg7[%c0_21, %c0_22] : memref<4x128xf32, #tpu.memory_space<vmem>>, vector<4x128xf32>
      %26 = vector.extract_strided_slice %24 {offsets = [0, 0], sizes = [16, 1], strides = [1, 1]} : vector<16x4xf32> to vector<16x1xf32>
      %27 = vector.extract_strided_slice %25 {offsets = [0, 0], sizes = [1, 128], strides = [1, 1]} : vector<4x128xf32> to vector<1x128xf32>
      %28 = vector.broadcast %26 : vector<16x1xf32> to vector<16x128xf32>
      %29 = vector.broadcast %27 : vector<1x128xf32> to vector<16x128xf32>
      %30 = arith.mulf %28, %29 : vector<16x128xf32>
      %31 = arith.addf %23, %30 : vector<16x128xf32>
      %32 = vector.extract_strided_slice %24 {offsets = [0, 1], sizes = [16, 1], strides = [1, 1]} : vector<16x4xf32> to vector<16x1xf32>
      %33 = vector.extract_strided_slice %25 {offsets = [1, 0], sizes = [1, 128], strides = [1, 1]} : vector<4x128xf32> to vector<1x128xf32>
      %34 = vector.broadcast %32 : vector<16x1xf32> to vector<16x128xf32>
      %35 = vector.broadcast %33 : vector<1x128xf32> to vector<16x128xf32>
      %36 = arith.mulf %34, %35 : vector<16x128xf32>
      %37 = arith.addf %31, %36 : vector<16x128xf32>
      %38 = vector.extract_strided_slice %24 {offsets = [0, 2], sizes = [16, 1], strides = [1, 1]} : vector<16x4xf32> to vector<16x1xf32>
      %39 = vector.extract_strided_slice %25 {offsets = [2, 0], sizes = [1, 128], strides = [1, 1]} : vector<4x128xf32> to vector<1x128xf32>
      %40 = vector.broadcast %38 : vector<16x1xf32> to vector<16x128xf32>
      %41 = vector.broadcast %39 : vector<1x128xf32> to vector<16x128xf32>
      %42 = arith.mulf %40, %41 : vector<16x128xf32>
      %43 = arith.addf %37, %42 : vector<16x128xf32>
      %44 = vector.extract_strided_slice %24 {offsets = [0, 3], sizes = [16, 1], strides = [1, 1]} : vector<16x4xf32> to vector<16x1xf32>
      %45 = vector.extract_strided_slice %25 {offsets = [3, 0], sizes = [1, 128], strides = [1, 1]} : vector<4x128xf32> to vector<1x128xf32>
      %46 = vector.broadcast %44 : vector<16x1xf32> to vector<16x128xf32>
      %47 = vector.broadcast %45 : vector<1x128xf32> to vector<16x128xf32>
      %48 = arith.mulf %46, %47 : vector<16x128xf32>
      %49 = arith.addf %43, %48 : vector<16x128xf32>
      %c0_23 = arith.constant 0 : index
      %c0_24 = arith.constant 0 : index
      %50 = vector.load %arg8[%c0_23, %c0_24] : memref<16x128xf32, #tpu.memory_space<vmem>>, vector<16x128xf32>
      tpu.vector_store %arg8[%c0_23, %c0_24], %49 {strides = array<i32>} : memref<16x128xf32, #tpu.memory_space<vmem>>, vector<16x128xf32>,
    } else {
    }
    return
  }
  func.func @transform_0(%arg0: i32, %arg1: i32, %arg2: i32) -> (i32, i32) {
    %c0_i32 = arith.constant 0 : i32
    return %arg0, %arg2 : i32, i32
  }
  func.func @transform_1(%arg0: i32, %arg1: i32, %arg2: i32) -> (i32, i32) {
    %c0_i32 = arith.constant 0 : i32
    return %arg1, %arg2 : i32, i32
  }
  func.func @transform_2(%arg0: i32, %arg1: i32, %arg2: i32) -> (i32, i32) {
    %c0_i32 = arith.constant 0 : i32
    %c0_i32_0 = arith.constant 0 : i32
    return %c0_i32, %arg1 : i32, i32
  }
  func.func @transform_3(%arg0: i32, %arg1: i32, %arg2: i32) -> (i32, i32) {
    %c0_i32 = arith.constant 0 : i32
    %c0_i32_0 = arith.constant 0 : i32
    return %arg2, %c0_i32 : i32, i32
  }
  func.func @transform_4(%arg0: i32, %arg1: i32, %arg2: i32) -> (i32, i32) {
    %c0_i32 = arith.constant 0 : i32
    %c0_i32_0 = arith.constant 0 : i32
    return %c0_i32, %arg1 : i32, i32
  }
  func.func @transform_5(%arg0: i32, %arg1: i32, %arg2: i32) -> (i32, i32) {
    %c0_i32 = arith.constant 0 : i32
    return %arg0, %arg1 : i32, i32
  }
}

</mosaic_0001>

<llo_original>
// kernel: tpu_custom_call.1
$region0: #{tpu_custom_call.1}
  #allocation0 [shape = 'u32[]', space=smem, size = 0x4, offset = 0x4, fixed_abs, tag = 'smem constant byte address 0x4 - core index']
  #allocation1 [shape = 'u32[72,128]{1,0:T(1,128)}', space=vmem, size = 0x9000, scoped, tag = 'internal scratch']
  #allocation2 [shape = 'f32[16,128]{1,0:T(8,128)}', space=vmem, size = 0x2000, scoped, tag = 'scratch operand']
  #allocation3 [shape = 'f32[16,4]{1,0:T(8,128)}', space=vmem, size = 0x2000, scoped, tag = 'scratch operand']
  %s0 = inlined_call_operand.hbm [shape: f32[16,128], index: 0, kind: input, shape index: {}]
  %s1 = inlined_call_operand.vmem [shape: f32[128,128], index: 1, kind: input, shape index: {}]
  %s2 = inlined_call_operand.vmem [shape: f32[1,128], index: 2, kind: input, shape index: {}]
  %s3 = inlined_call_operand.vmem [shape: f32[128,4], index: 3, kind: input, shape index: {}]
  %s4 = inlined_call_operand.vmem [shape: f32[4,128], index: 4, kind: input, shape index: {}]
  %s5 = inlined_call_operand.hbm [shape: f32[16,128], index: 5, kind: output, shape index: {}]
  %s6 = sld [smem:[#allocation0]]
  $region50: #{tpu_custom_call.1} parent=0
    _
  %s8 = ssub.s32 1, %s6
  %s9 = scalar_select 0, %s8, %s6
  $region1: #{tpu_custom_call.1} parent=0
    #allocation4 [shape = 'u8[8192]{0}', space=vmem, size = 0x2000, scoped, tag = 'input window, operand 0, single buffered']
    #allocation5 [shape = 's32[1]{0}', space=sflag, size = 0x4, scoped, tag = 'scoped memory for tpu_custom_call.1']
    #allocation6 [shape = 's32[1]{0}', space=sflag, size = 0x4, scoped, tag = 'scoped memory for tpu_custom_call.1']
    #allocation7 [shape = 'u8[8192]{0}', space=vmem, size = 0x2000, scoped, tag = 'output window, operand 0, single buffered']
    %10 = vsyncpa [#allocation5], 0
    %11 = vsyncpa [#allocation6], 0
    // Predicated region
    $region2: #{tpu_custom_call.1} parent=1 // pred_check
      _
    $region3: #{tpu_custom_call.1} parent=1 // pred_check_branch
      %13 = sbr.rel (0) target = $region5
    $region4: #{tpu_custom_call.1} parent=1 // pred_region
      %15 = vsyncadd [#allocation5], 0
      %s16 = sshll.u32 %s0, 4
      %s17 = int_to_ptr.hbm [resolvable:$true] %s16
      %s18 = sshll.u32 [#allocation4], 4
      %s19 = int_to_ptr.vmem [resolvable:$true] %s18
      %24 = dma.hbm_to_vmem [thread:$0]  %s17, 256, %s19, [#allocation5], 128, 128, 8
    $region5: #{tpu_custom_call.1} parent=1 // pred_fallthru
      _
    // Predicated region
    $region6: #{tpu_custom_call.1} parent=1 // pred_check
      _
    $region7: #{tpu_custom_call.1} parent=1 // pred_check_branch
      %26 = sbr.rel (0) target = $region9
    $region8: #{tpu_custom_call.1} parent=1 // pred_region
      _
    $region9: #{tpu_custom_call.1} parent=1 // pred_fallthru
      _
    // Predicated region
    $region10: #{tpu_custom_call.1} parent=1 // pred_check
      _
    $region11: #{tpu_custom_call.1} parent=1 // pred_check_branch
      %28 = sbr.rel (0) target = $region13
    $region12: #{tpu_custom_call.1} parent=1 // pred_region
      _
    $region13: #{tpu_custom_call.1} parent=1 // pred_fallthru
      _
    // Predicated region
    $region14: #{tpu_custom_call.1} parent=1 // pred_check
      _
    $region15: #{tpu_custom_call.1} parent=1 // pred_check_branch
      %30 = sbr.rel (0) target = $region17
    $region16: #{tpu_custom_call.1} parent=1 // pred_region
      _
    $region17: #{tpu_custom_call.1} parent=1 // pred_fallthru
      _
    // Predicated region
    $region18: #{tpu_custom_call.1} parent=1 // pred_check
      _
    $region19: #{tpu_custom_call.1} parent=1 // pred_check_branch
      %32 = sbr.rel (0) target = $region21
    $region20: #{tpu_custom_call.1} parent=1 // pred_region
      _
    $region21: #{tpu_custom_call.1} parent=1 // pred_fallthru
      _
    // Predicated region
    $region22: #{tpu_custom_call.1} parent=1 // pred_check
      _
    $region23: #{tpu_custom_call.1} parent=1 // pred_check_branch
      %34 = sbr.rel (0) target = $region25
    $region24: #{tpu_custom_call.1} parent=1 // pred_region
      %36 = dma.done [#allocation5], 256
    $region25: #{tpu_custom_call.1} parent=1 // pred_fallthru
      _
    %p37 = scmp.eq.s32.totalorder 0, 0
    // Predicated region
    $region26: #{tpu_custom_call.1} parent=1 // pred_check
      %p38 = pneg %p37
    $region27: #{tpu_custom_call.1} parent=1 // pred_check_branch
      %40 = sbr.rel (%p38) target = $region29
    $region28: #{tpu_custom_call.1} parent=1 // pred_region
      %41 = vst [vmem:[#allocation2] sm:$0xff] 0.0
      %42 = vst [vmem:[#allocation2 + $0x8] sm:$0xff] 0.0
    $region29: #{tpu_custom_call.1} parent=1 // pred_fallthru
      _
    %p43 = scmp.eq.s32.totalorder 0, 0
    %p44 = pnand %p43, %p37
    %p45 = pneg %p44
    // Predicated region
    $region30: #{tpu_custom_call.1} parent=1 // pred_check
      _
    $region31: #{tpu_custom_call.1} parent=1 // pred_check_branch
      %47 = sbr.rel (%p44) target = $region33
    $region32: #{tpu_custom_call.1} parent=1 // pred_region
      %vm48 = vcmask 31744
      %49 = vst.msk [vmem:[#allocation3] sm:$0xff] %vm48, 0.0
      %50 = vst.msk [vmem:[#allocation3 + $0x8] sm:$0xff] %vm48, 0.0
    $region33: #{tpu_custom_call.1} parent=1 // pred_fallthru
      _
    %v51 = vld [vmem:[#allocation4] sm:$0xff]
    %v52 = vld [vmem:[#allocation4 + $0x8] sm:$0xff]
    %v53 = vld [vmem:[#allocation2] sm:$0xff]
    %v54 = vld [vmem:[#allocation2 + $0x8] sm:$0xff]
    %v55 = vld [vmem:[%s1] sm:$0xff]
    %v56 = vld [vmem:[%s1 + $0x8] sm:$0xff]
    %v57 = vld [vmem:[%s1 + $0x10] sm:$0xff]
    %v58 = vld [vmem:[%s1 + $0x18] sm:$0xff]
    %v59 = vld [vmem:[%s1 + $0x20] sm:$0xff]
    %v60 = vld [vmem:[%s1 + $0x28] sm:$0xff]
    %v61 = vld [vmem:[%s1 + $0x30] sm:$0xff]
    %v62 = vld [vmem:[%s1 + $0x38] sm:$0xff]
    %v63 = vld [vmem:[%s1 + $0x40] sm:$0xff]
    %v64 = vld [vmem:[%s1 + $0x48] sm:$0xff]
    %v65 = vld [vmem:[%s1 + $0x50] sm:$0xff]
    %v66 = vld [vmem:[%s1 + $0x58] sm:$0xff]
    %v67 = vld [vmem:[%s1 + $0x60] sm:$0xff]
    %v68 = vld [vmem:[%s1 + $0x68] sm:$0xff]
    %v69 = vld [vmem:[%s1 + $0x70] sm:$0xff]
    %v70 = vld [vmem:[%s1 + $0x78] sm:$0xff]
    %71 = vmatpush.xpose.msra.mxu0 %v70
    %72 = vmatpush.xpose.msra.mxu0 %v69
    %73 = vmatpush.xpose.msra.mxu0 %v68
    %74 = vmatpush.xpose.msra.mxu0 %v67
    %75 = vmatpush.xpose.msra.mxu0 %v66
    %76 = vmatpush.xpose.msra.mxu0 %v65
    %77 = vmatpush.xpose.msra.mxu0 %v64
    %78 = vmatpush.xpose.msra.mxu0 %v63
    %79 = vmatpush.xpose.msra.mxu0 %v62
    %80 = vmatpush.xpose.msra.mxu0 %v61
    %81 = vmatpush.xpose.msra.mxu0 %v60
    %82 = vmatpush.xpose.msra.mxu0 %v59
    %83 = vmatpush.xpose.msra.mxu0 %v58
    %84 = vmatpush.xpose.msra.mxu0 %v57
    %85 = vmatpush.xpose.msra.mxu0 %v56
    %86 = vmatpush.xpose.msra.mxu0 %v55
    %87 = vmatmul.f32.gmra.mxu0 %v51
    %v88 = vpop.f32.mrf.mxu0
    %v89 = vadd.f32 0.0, %v88
    %90 = vmatmul.f32.gmra.mxu0 %v52
    %v91 = vpop.f32.mrf.mxu0
    %v92 = vadd.f32 0.0, %v91
    %93 = vdwg.mxu0
    %v94 = vadd.f32 %v53, %v89
    %v95 = vadd.f32 %v54, %v92
    %96 = vst [vmem:[#allocation2] sm:$0xff] %v94
    %97 = vst [vmem:[#allocation2 + $0x8] sm:$0xff] %v95
    // Predicated region
    $region34: #{tpu_custom_call.1} parent=1 // pred_check
      %p98 = pneg %p43
    $region35: #{tpu_custom_call.1} parent=1 // pred_check_branch
      %100 = sbr.rel (%p98) target = $region37
    $region36: #{tpu_custom_call.1} parent=1 // pred_region
      %v101 = vld [vmem:[#allocation3] sm:$0xff]
      %v102 = vld [vmem:[#allocation3 + $0x8] sm:$0xff]
      %v103 = vld [vmem:[%s3] sm:$0xff]
      %v104 = vld [vmem:[%s3 + $0x8] sm:$0xff]
      %v105 = vld [vmem:[%s3 + $0x10] sm:$0xff]
      %v106 = vld [vmem:[%s3 + $0x18] sm:$0xff]
      %v107 = vld [vmem:[%s3 + $0x20] sm:$0xff]
      %v108 = vld [vmem:[%s3 + $0x28] sm:$0xff]
      %v109 = vld [vmem:[%s3 + $0x30] sm:$0xff]
      %v110 = vld [vmem:[%s3 + $0x38] sm:$0xff]
      %v111 = vld [vmem:[%s3 + $0x40] sm:$0xff]
      %v112 = vld [vmem:[%s3 + $0x48] sm:$0xff]
      %v113 = vld [vmem:[%s3 + $0x50] sm:$0xff]
      %v114 = vld [vmem:[%s3 + $0x58] sm:$0xff]
      %v115 = vld [vmem:[%s3 + $0x60] sm:$0xff]
      %v116 = vld [vmem:[%s3 + $0x68] sm:$0xff]
      %v117 = vld [vmem:[%s3 + $0x70] sm:$0xff]
      %v118 = vld [vmem:[%s3 + $0x78] sm:$0xff]
      %119 = vmatpush.msra.mxu0 %v118
      %120 = vmatpush.msra.mxu0 %v117
      %121 = vmatpush.msra.mxu0 %v116
      %122 = vmatpush.msra.mxu0 %v115
      %123 = vmatpush.msra.mxu0 %v114
      %124 = vmatpush.msra.mxu0 %v113
      %125 = vmatpush.msra.mxu0 %v112
      %126 = vmatpush.msra.mxu0 %v111
      %127 = vmatpush.msra.mxu0 %v110
      %128 = vmatpush.msra.mxu0 %v109
      %129 = vmatpush.msra.mxu0 %v108
      %130 = vmatpush.msra.mxu0 %v107
      %131 = vmatpush.msra.mxu0 %v106
      %132 = vmatpush.msra.mxu0 %v105
      %133 = vmatpush.msra.mxu0 %v104
      %134 = vmatpush.msra.mxu0 %v103
      %135 = vmatmul.f32.gmra.mxu0 %v51
      %v136 = vpop.f32.mrf.mxu0
      %v137 = vadd.f32 0.0, %v136
      %138 = vmatmul.f32.gmra.mxu0 %v52
      %v139 = vpop.f32.mrf.mxu0
      %v140 = vadd.f32 0.0, %v139
      %141 = vdwg.mxu0
      %v142 = vadd.f32 %v101, %v137
      %v143 = vadd.f32 %v102, %v140
      %vm144 = vcmask 31744
      %145 = vst.msk [vmem:[#allocation3] sm:$0xff] %vm144, %v142
      %146 = vst.msk [vmem:[#allocation3 + $0x8] sm:$0xff] %vm144, %v143
    $region37: #{tpu_custom_call.1} parent=1 // pred_fallthru
      _
    // Predicated region
    $region38: #{tpu_custom_call.1} parent=1 // pred_check
      %p147 = pneg %p37
    $region39: #{tpu_custom_call.1} parent=1 // pred_check_branch
      %149 = sbr.rel (%p147) target = $region41
    $region40: #{tpu_custom_call.1} parent=1 // pred_region
      %v150 = vld [vmem:[#allocation2] sm:$0xff]
      %v151 = vld [vmem:[#allocation2 + $0x8] sm:$0xff]
      %v152 = vld [vmem:[%s2] sm:$0x1]
      %v154 = vperm.slane %v152, 0
      %v156 = vadd.f32 %v150, %v154
      %v157 = vadd.f32 %v151, %v154
      %v158 = vld [vmem:[#allocation3] sm:$0xff]
      %v159 = vld [vmem:[#allocation3 + $0x8] sm:$0xff]
      %v160 = vld [vmem:[%s4] sm:$0xf]
      %162 = vset.pattern.permute.xlu0 0
      %163 = vperm.xlu0 %162, %v158
      %v164 = vpop.permute.xlu0 %163
      %167 = vset.pattern.permute.xlu0 0
      %168 = vperm.xlu0 %167, %v159
      %v169 = vpop.permute.xlu0 %168
      %v171 = vperm.slane %v160, 0
      %v172 = vmul.f32 %v164, %v171
      %v173 = vmul.f32 %v169, %v171
      %v174 = vadd.f32 %v156, %v172
      %v175 = vadd.f32 %v157, %v173
      %176 = vset.pattern.permute.xlu0 1
      %177 = vperm.xlu0 %176, %v158
      %v178 = vpop.permute.xlu0 %177
      %180 = vset.pattern.permute.xlu0 1
      %181 = vperm.xlu0 %180, %v159
      %v182 = vpop.permute.xlu0 %181
      %v184 = vperm.slane %v160, 1
      %v185 = vmul.f32 %v178, %v184
      %v186 = vmul.f32 %v182, %v184
      %v187 = vadd.f32 %v174, %v185
      %v188 = vadd.f32 %v175, %v186
      %189 = vset.pattern.permute.xlu0 2
      %190 = vperm.xlu0 %189, %v158
      %v191 = vpop.permute.xlu0 %190
      %193 = vset.pattern.permute.xlu0 2
      %194 = vperm.xlu0 %193, %v159
      %v195 = vpop.permute.xlu0 %194
      %v197 = vperm.slane %v160, 2
      %v198 = vmul.f32 %v191, %v197
      %v199 = vmul.f32 %v195, %v197
      %v200 = vadd.f32 %v187, %v198
      %v201 = vadd.f32 %v188, %v199
      %202 = vset.pattern.permute.xlu0 3
      %203 = vperm.xlu0 %202, %v158
      %v204 = vpop.permute.xlu0 %203
      %206 = vset.pattern.permute.xlu0 3
      %207 = vperm.xlu0 %206, %v159
      %v208 = vpop.permute.xlu0 %207
      %v210 = vperm.slane %v160, 3
      %v211 = vmul.f32 %v204, %v210
      %v212 = vmul.f32 %v208, %v210
      %v213 = vadd.f32 %v200, %v211
      %v214 = vadd.f32 %v201, %v212
      %215 = vst [vmem:[#allocation7] sm:$0xff] %v213
      %216 = vst [vmem:[#allocation7 + $0x8] sm:$0xff] %v214
    $region41: #{tpu_custom_call.1} parent=1 // pred_fallthru
      _
    // Predicated region
    $region42: #{tpu_custom_call.1} parent=1 // pred_check
      _
    $region43: #{tpu_custom_call.1} parent=1 // pred_check_branch
      %218 = sbr.rel (0) target = $region45
    $region44: #{tpu_custom_call.1} parent=1 // pred_region
      %220 = vsyncadd [#allocation6], 0
      %s221 = sshll.u32 [#allocation7], 4
      %s222 = int_to_ptr.vmem [resolvable:$true] %s221
      %s223 = sshll.u32 %s5, 4
      %s224 = int_to_ptr.hbm [resolvable:$true] %s223
      %229 = dma.vmem_to_hbm [thread:$0]  %s222, 256, %s224, [#allocation6], 128, 128, 8
    $region45: #{tpu_custom_call.1} parent=1 // pred_fallthru
      _
    // Predicated region
    $region46: #{tpu_custom_call.1} parent=1 // pred_check
      _
    $region47: #{tpu_custom_call.1} parent=1 // pred_check_branch
      %231 = sbr.rel (0) target = $region49
    $region48: #{tpu_custom_call.1} parent=1 // pred_region
      %233 = dma.done [#allocation6], 256
    $region49: #{tpu_custom_call.1} parent=1 // pred_fallthru
      _
    %234 = vsyncpa [#allocation5], 1
    %235 = vsyncpa [#allocation6], 1

</llo_original>
